<compile_context>
chip_gen: v7x
topology: tpu7x:2x2x1
jax: 0.10.0
libtpu: 0.0.40
codegen_flags: <defaults>
</compile_context>

<pallas_src>
import jax
import jax.numpy as jnp
from jax import lax
from jax.experimental import pallas as pl
from jax.experimental.pallas import tpu as pltpu

STATE_DIM = 11      # SpotEnv.state_dim
HIDDEN_DIM = 128    # hidden_dim in the reference script
CHUNK = 256         # rows per inner step; (CHUNK, HIDDEN) f32 stays in vregs


def _valuenet_kernel(x_ref, w1_ref, b1_ref, w2_ref, b2_ref, o_ref):
    S = x_ref.shape[1]
    H = w1_ref.shape[1]
    tb = x_ref.shape[0]
    n_chunks = tb // CHUNK  # static; tb is a multiple of CHUNK by construction

    # Hoisted across the chunk loop: weights/biases live in vregs for the tile.
    w1 = w1_ref[...].astype(jnp.bfloat16)                         # (S, H)
    b1 = b1_ref[...]                                              # (1, H) f32
    # 8-row copy of w2 keeps the layer-2 matmul at the MXU's native sublane
    # granularity; only row 0 of the result is stored.
    w2 = jnp.broadcast_to(w2_ref[...], (8, H)).astype(jnp.bfloat16)
    b2 = b2_ref[0, 0]                                             # SMEM scalar

    def body(c, carry):
        r0 = pl.multiple_of(c * CHUNK, CHUNK)
        x = x_ref[pl.ds(r0, CHUNK), :].astype(jnp.bfloat16)       # (CHUNK, S)
        # Layer 1 on the MXU (bf16 operands, f32 accumulation); bias+ReLU on VPU.
        h = jnp.dot(x, w1, preferred_element_type=jnp.float32)    # (CHUNK, H)
        h = jnp.maximum(h + b1, 0.0).astype(jnp.bfloat16)
        # Layer 2 as an NT matmul (contract last dims): batch rows land on
        # lanes, so the chunk result is lane-dense -> dense stores.
        y = lax.dot_general(w2, h, (((1,), (1,)), ((), ())),
                            preferred_element_type=jnp.float32)   # (8, CHUNK)
        o_ref[0, :, pl.ds(r0, CHUNK)] = y[0:1, :] + b2            # (1, CHUNK)
        return carry

    lax.fori_loop(0, n_chunks, body, 0)


def value_net_forward(x, w1, b1, w2, b2, *, tile_batch=16384):
    """ValueNet forward.

    x : (B, STATE_DIM) f32
    w1: (STATE_DIM, HIDDEN) f32  (transpose of torch fc1.weight)
    b1: (1, HIDDEN) f32
    w2: (HIDDEN, 1) f32          (transpose of torch fc2.weight)
    b2: (1, 1) f32
    returns (B, 1) f32
    """
    B, S = x.shape
    H = w1.shape[1]

    # Batch tile: multiple of CHUNK, capped at ~B/2 so v7x's two TCs both get
    # grid steps, and at tile_batch so double-buffered VMEM stays ~< 20 MiB.
    half = pl.cdiv(pl.cdiv(B, 2), CHUNK) * CHUNK
    tb = max(CHUNK, min((tile_batch // CHUNK) * CHUNK, half))
    num_tiles = pl.cdiv(B, tb)

    b1_row = b1.reshape(1, H)
    w2_row = w2.reshape(1, H)          # (H,1) -> (1,H): pure relabel (dim was 1)
    b2_s = b2.reshape(1, 1)

    cost = pl.CostEstimate(
        flops=2 * B * H * (S + 1),
        transcendentals=0,
        bytes_accessed=B * (S + 1) * 4 + (S * H + 2 * H + 1) * 4,
    )

    out = pl.pallas_call(
        _valuenet_kernel,
        out_shape=jax.ShapeDtypeStruct((num_tiles, 1, tb), jnp.float32),
        grid=(num_tiles,),
        in_specs=[
            # x tile marches with the grid (last dim == full array dim, so the
            # (8,128) rule doesn't trigger); weights keep a constant index_map
            # and stay VMEM-resident across iterations.
            pl.BlockSpec((tb, S), lambda i: (i, 0)),
            pl.BlockSpec((S, H), lambda i: (0, 0)),
            pl.BlockSpec((1, H), lambda i: (0, 0)),
            pl.BlockSpec((1, H), lambda i: (0, 0)),
            pl.BlockSpec(memory_space=pltpu.MemorySpace.SMEM),   # (1,1) scalar b2
        ],
        out_specs=pl.BlockSpec((1, 1, tb), lambda i: (i, 0, 0)),
        compiler_params=pltpu.CompilerParams(
            dimension_semantics=("parallel",),   # shard batch tiles across TCs
        ),
        cost_estimate=cost,
    )(x, w1, b1_row, w2_row, b2_s)

    # (num_tiles, 1, tb) -> (B, 1); drops any ragged-tail garbage rows.
    return out.reshape(num_tiles * tb)[:B].reshape(B, 1)


def _reference(x, w1, b1, w2, b2):
    """Pure-JAX reference reproducing the kernel's bf16 operand quantization."""
    f32 = jnp.float32
    xq = x.astype(jnp.bfloat16).astype(f32)
    w1q = w1.astype(jnp.bfloat16).astype(f32)
    h = jnp.maximum(xq @ w1q + b1.reshape(1, -1), 0.0)
    hq = h.astype(jnp.bfloat16).astype(f32)
    w2q = w2.astype(jnp.bfloat16).astype(f32)
    return hq @ w2q.reshape(-1, 1) + b2.reshape(1, 1)


def init_params(key, state_dim=STATE_DIM, hidden_dim=HIDDEN_DIM):
    """Deterministic init mimicking torch.nn.Linear default U(-1/sqrt(fan_in), +)."""
    k1, k2, k3, k4 = jax.random.split(key, 4)
    bound1 = 1.0 / jnp.sqrt(jnp.float32(state_dim))
    bound2 = 1.0 / jnp.sqrt(jnp.float32(hidden_dim))
    # stored as (in, out), i.e. transpose of torch's (out, in)
    w1 = jax.random.uniform(k1, (state_dim, hidden_dim), jnp.float32, -bound1, bound1)
    b1 = jax.random.uniform(k2, (1, hidden_dim), jnp.float32, -bound1, bound1)
    w2 = jax.random.uniform(k3, (hidden_dim, 1), jnp.float32, -bound2, bound2)
    b2 = jax.random.uniform(k4, (1, 1), jnp.float32, -bound2, bound2)
    return w1, b1, w2, b2


if __name__ == "__main__":
    key = jax.random.PRNGKey(0)
    pkey, xkey = jax.random.split(key)
    w1, b1, w2, b2 = init_params(pkey)

    # Small shapes; B=600 with tile_batch=256 exercises a multi-step grid with a
    # ragged (masked) last block, B=256 an exact single tile.
    for B in (256, 600):
        x = jax.random.normal(jax.random.fold_in(xkey, B), (B, STATE_DIM), jnp.float32)
        out = jax.block_until_ready(
            value_net_forward(x, w1, b1, w2, b2, tile_batch=256))
        assert out.shape == (B, 1), out.shape

        ref = _reference(x, w1, b1, w2, b2)
        max_err = float(jnp.max(jnp.abs(out - ref)))
        assert jnp.allclose(out, ref, atol=2e-3, rtol=2e-3), (B, max_err)

    print("KERNEL_OK")
</pallas_src>

<mosaic_0001>
module attributes {stable_mosaic.version = 11 : i64} {
  func.func @_valuenet_kernel(%arg0: i32, %arg1: memref<256x11xf32, #tpu.memory_space<vmem>>, %arg2: memref<11x128xf32, #tpu.memory_space<vmem>>, %arg3: memref<1x128xf32, #tpu.memory_space<vmem>>, %arg4: memref<1x128xf32, #tpu.memory_space<vmem>>, %arg5: memref<1x1xf32, #tpu.memory_space<smem>>, %arg6: memref<1x1x256xf32, #tpu.memory_space<vmem>>) attributes {dimension_semantics = [#tpu.dimension_semantics<parallel>], iteration_bounds = array<i64: 1>, scalar_prefetch = 0 : i64, scratch_operands = 0 : i64, tpu.core_type = #tpu.core_type<tc>, window_params = [{transform_indices = @transform_0, window_bounds = array<i64: 256, 11>}, {pipeline_mode = #tpu.pipeline_mode<synchronous>, transform_indices = @transform_1, window_bounds = array<i64: 11, 128>}, {pipeline_mode = #tpu.pipeline_mode<synchronous>, transform_indices = @transform_2, window_bounds = array<i64: 1, 128>}, {pipeline_mode = #tpu.pipeline_mode<synchronous>, transform_indices = @transform_3, window_bounds = array<i64: 1, 128>}, {transform_indices = @transform_4, window_bounds = array<i64: 1, 1>}, {transform_indices = @transform_5, window_bounds = array<i64: 1, 1, 256>}]} {
    %c0 = arith.constant 0 : index
    %c0_0 = arith.constant 0 : index
    %0 = vector.load %arg2[%c0, %c0_0] : memref<11x128xf32, #tpu.memory_space<vmem>>, vector<11x128xf32>
    %1 = arith.truncf %0 : vector<11x128xf32> to vector<11x128xbf16>
    %c0_1 = arith.constant 0 : index
    %c0_2 = arith.constant 0 : index
    %2 = vector.load %arg3[%c0_1, %c0_2] : memref<1x128xf32, #tpu.memory_space<vmem>>, vector<1x128xf32>
    %c0_3 = arith.constant 0 : index
    %c0_4 = arith.constant 0 : index
    %3 = vector.load %arg4[%c0_3, %c0_4] : memref<1x128xf32, #tpu.memory_space<vmem>>, vector<1x128xf32>
    %4 = vector.shape_cast %3 : vector<1x128xf32> to vector<1x128xf32>
    %5 = vector.broadcast %4 : vector<1x128xf32> to vector<8x128xf32>
    %6 = arith.truncf %5 : vector<8x128xf32> to vector<8x128xbf16>
    %c0_5 = arith.constant 0 : index
    %c0_6 = arith.constant 0 : index
    %7 = memref.load %arg5[%c0_5, %c0_6] : memref<1x1xf32, #tpu.memory_space<smem>>
    %c0_i32 = arith.constant 0 : i32
    %c256_i32 = arith.constant 256 : i32
    %8 = arith.muli %c0_i32, %c256_i32 : i32
    %9 = tpu.assume_multiple %8, 256 : i32
    %10 = arith.index_cast %9 : i32 to index
    %c0_7 = arith.constant 0 : index
    %11 = vector.load %arg1[%10, %c0_7] : memref<256x11xf32, #tpu.memory_space<vmem>>, vector<256x11xf32>
    %12 = arith.truncf %11 : vector<256x11xf32> to vector<256x11xbf16>
    %cst = arith.constant dense<0.000000e+00> : vector<256x128xf32>
    %13 = tpu.matmul %12, %1, %cst {dimension_numbers = #tpu.dot_dimension_numbers<[1], [0], [0], [1], [0, 0, 1, 1], [], []>} : vector<256x11xbf16>, vector<11x128xbf16>, vector<256x128xf32> -> vector<256x128xf32>
    %14 = vector.broadcast %2 : vector<1x128xf32> to vector<256x128xf32>
    %15 = arith.addf %13, %14 : vector<256x128xf32>
    %cst_8 = arith.constant 0.000000e+00 : f32
    %16 = vector.broadcast %cst_8 : f32 to vector<256x128xf32>
    %17 = arith.maximumf %15, %16 : vector<256x128xf32>
    %18 = arith.truncf %17 : vector<256x128xf32> to vector<256x128xbf16>
    %cst_9 = arith.constant dense<0.000000e+00> : vector<8x256xf32>
    %19 = tpu.matmul %6, %18, %cst_9 {dimension_numbers = #tpu.dot_dimension_numbers<[1], [1], [0], [0], [0, 0, 1, 0], [], []>} : vector<8x128xbf16>, vector<256x128xbf16>, vector<8x256xf32> -> vector<8x256xf32>
    %20 = vector.extract_strided_slice %19 {offsets = [0, 0], sizes = [1, 256], strides = [1, 1]} : vector<8x256xf32> to vector<1x256xf32>
    %21 = vector.broadcast %7 : f32 to vector<1x256xf32>
    %22 = arith.addf %20, %21 : vector<1x256xf32>
    %c0_10 = arith.constant 0 : index
    %c0_11 = arith.constant 0 : index
    %23 = arith.index_cast %9 : i32 to index
    %24 = vector.load %arg6[%c0_10, %c0_11, %23] : memref<1x1x256xf32, #tpu.memory_space<vmem>>, vector<1x1x256xf32>
    %25 = vector.shape_cast %24 : vector<1x1x256xf32> to vector<1x256xf32>
    %26 = vector.shape_cast %22 : vector<1x256xf32> to vector<1x1x256xf32>
    tpu.vector_store %arg6[%c0_10, %c0_11, %23], %26 {strides = array<i32>} : memref<1x1x256xf32, #tpu.memory_space<vmem>>, vector<1x1x256xf32>,
    %c1_i32 = arith.constant 1 : i32
    return
  }
  func.func @transform_0(%arg0: i32) -> (i32, i32) {
    %c0_i32 = arith.constant 0 : i32
    %c0_i32_0 = arith.constant 0 : i32
    return %arg0, %c0_i32 : i32, i32
  }
  func.func @transform_1(%arg0: i32) -> (i32, i32) {
    %c0_i32 = arith.constant 0 : i32
    %c0_i32_0 = arith.constant 0 : i32
    %c0_i32_1 = arith.constant 0 : i32
    return %c0_i32, %c0_i32_0 : i32, i32
  }
  func.func @transform_2(%arg0: i32) -> (i32, i32) {
    %c0_i32 = arith.constant 0 : i32
    %c0_i32_0 = arith.constant 0 : i32
    %c0_i32_1 = arith.constant 0 : i32
    return %c0_i32, %c0_i32_0 : i32, i32
  }
  func.func @transform_3(%arg0: i32) -> (i32, i32) {
    %c0_i32 = arith.constant 0 : i32
    %c0_i32_0 = arith.constant 0 : i32
    %c0_i32_1 = arith.constant 0 : i32
    return %c0_i32, %c0_i32_0 : i32, i32
  }
  func.func @transform_4(%arg0: i32) -> (i32, i32) {
    %c0_i32 = arith.constant 0 : i32
    %c0_i32_0 = arith.constant 0 : i32
    %c0_i32_1 = arith.constant 0 : i32
    return %c0_i32, %c0_i32_0 : i32, i32
  }
  func.func @transform_5(%arg0: i32) -> (i32, i32, i32) {
    %c0_i32 = arith.constant 0 : i32
    %c0_i32_0 = arith.constant 0 : i32
    %c0_i32_1 = arith.constant 0 : i32
    return %arg0, %c0_i32, %c0_i32_0 : i32, i32, i32
  }
}

</mosaic_0001>

<llo_original>
// kernel: tpu_custom_call.1
$region0: #{tpu_custom_call.1}
  #allocation0 [shape = 'u32[]', space=smem, size = 0x4, offset = 0x4, fixed_abs, tag = 'smem constant byte address 0x4 - core index']
  #allocation1 [shape = 'u32[144,128]{1,0:T(1,128)}', space=vmem, size = 0x12000, scoped, tag = 'internal scratch']
  #allocation2 [shape = 'f32[1,1]{1,0:T(1,128)S(6)}', space=smem, size = 0x200, scoped, tag = 'scoped memory for tpu_custom_call.1']
  %s0 = inlined_call_operand.vmem [shape: f32[256,11], index: 0, kind: input, shape index: {}]
  %s1 = inlined_call_operand.vmem [shape: f32[11,128], index: 1, kind: input, shape index: {}]
  %s2 = inlined_call_operand.vmem [shape: f32[1,128], index: 2, kind: input, shape index: {}]
  %s3 = inlined_call_operand.vmem [shape: f32[1,128], index: 3, kind: input, shape index: {}]
  %s4 = inlined_call_operand.<no memory space> [shape: f32[1,1], index: 4, kind: input, shape index: {}]
  %s5 = inlined_call_operand.hbm [shape: f32[1,1,256], index: 5, kind: output, shape index: {}]
  %s6 = sld [smem:[#allocation0]]
  $region30: #{tpu_custom_call.1} parent=0
    _
  %s8 = ssub.s32 1, %s6
  %s9 = scalar_select 0, %s8, %s6
  %10 = sst [smem:[#allocation2]] %s4
  $region1: #{tpu_custom_call.1} parent=0
    #allocation3 [shape = 'u8[1024]{0}', space=vmem, size = 0x400, scoped, tag = 'output window, operand 0, single buffered']
    #allocation4 [shape = 's32[1]{0}', space=sflag, size = 0x4, scoped, tag = 'scoped memory for tpu_custom_call.1']
    %11 = vsyncpa [#allocation4], 0
    // Predicated region
    $region2: #{tpu_custom_call.1} parent=1 // pred_check
      _
    $region3: #{tpu_custom_call.1} parent=1 // pred_check_branch
      %13 = sbr.rel (0) target = $region5
    $region4: #{tpu_custom_call.1} parent=1 // pred_region
      _
    $region5: #{tpu_custom_call.1} parent=1 // pred_fallthru
      _
    // Predicated region
    $region6: #{tpu_custom_call.1} parent=1 // pred_check
      _
    $region7: #{tpu_custom_call.1} parent=1 // pred_check_branch
      %15 = sbr.rel (0) target = $region9
    $region8: #{tpu_custom_call.1} parent=1 // pred_region
      _
    $region9: #{tpu_custom_call.1} parent=1 // pred_fallthru
      _
    // Predicated region
    $region10: #{tpu_custom_call.1} parent=1 // pred_check
      _
    $region11: #{tpu_custom_call.1} parent=1 // pred_check_branch
      %17 = sbr.rel (0) target = $region13
    $region12: #{tpu_custom_call.1} parent=1 // pred_region
      _
    $region13: #{tpu_custom_call.1} parent=1 // pred_fallthru
      _
    // Predicated region
    $region14: #{tpu_custom_call.1} parent=1 // pred_check
      _
    $region15: #{tpu_custom_call.1} parent=1 // pred_check_branch
      %19 = sbr.rel (0) target = $region17
    $region16: #{tpu_custom_call.1} parent=1 // pred_region
      _
    $region17: #{tpu_custom_call.1} parent=1 // pred_fallthru
      _
    // Predicated region
    $region18: #{tpu_custom_call.1} parent=1 // pred_check
      _
    $region19: #{tpu_custom_call.1} parent=1 // pred_check_branch
      %21 = sbr.rel (0) target = $region21
    $region20: #{tpu_custom_call.1} parent=1 // pred_region
      _
    $region21: #{tpu_custom_call.1} parent=1 // pred_fallthru
      _
    %v23 = vld [vmem:[%s1] sm:$0xff]
    %v24 = vld [vmem:[%s1 + $0x8] sm:$0x7]
    %v25 = vpack.c.bf16 %v24, %v23
    %v26 = vld [vmem:[%s2] sm:$0x1]
    %v27 = vld [vmem:[%s3] sm:$0x1]
    %v29 = vlaneseq
    %v30 = vshrl.u32 %v29, 7
    %v31 = vsub.s32 0, %v30
    %v32 = vrot.slane %v27, %v31
    %v34 = vpack.c.bf16 %v32, %v32
    %s35 = sld [smem:[#allocation2]]
    %v36 = vld [vmem:[%s0] sm:$0xff]
    %v37 = vld [vmem:[%s0 + $0x8] sm:$0xff]
    %v38 = vld [vmem:[%s0 + $0x10] sm:$0xff]
    %v39 = vld [vmem:[%s0 + $0x18] sm:$0xff]
    %v40 = vld [vmem:[%s0 + $0x20] sm:$0xff]
    %v41 = vld [vmem:[%s0 + $0x28] sm:$0xff]
    %v42 = vld [vmem:[%s0 + $0x30] sm:$0xff]
    %v43 = vld [vmem:[%s0 + $0x38] sm:$0xff]
    %v44 = vld [vmem:[%s0 + $0x40] sm:$0xff]
    %v45 = vld [vmem:[%s0 + $0x48] sm:$0xff]
    %v46 = vld [vmem:[%s0 + $0x50] sm:$0xff]
    %v47 = vld [vmem:[%s0 + $0x58] sm:$0xff]
    %v48 = vld [vmem:[%s0 + $0x60] sm:$0xff]
    %v49 = vld [vmem:[%s0 + $0x68] sm:$0xff]
    %v50 = vld [vmem:[%s0 + $0x70] sm:$0xff]
    %v51 = vld [vmem:[%s0 + $0x78] sm:$0xff]
    %v52 = vld [vmem:[%s0 + $0x80] sm:$0xff]
    %v53 = vld [vmem:[%s0 + $0x88] sm:$0xff]
    %v54 = vld [vmem:[%s0 + $0x90] sm:$0xff]
    %v55 = vld [vmem:[%s0 + $0x98] sm:$0xff]
    %v56 = vld [vmem:[%s0 + $0xa0] sm:$0xff]
    %v57 = vld [vmem:[%s0 + $0xa8] sm:$0xff]
    %v58 = vld [vmem:[%s0 + $0xb0] sm:$0xff]
    %v59 = vld [vmem:[%s0 + $0xb8] sm:$0xff]
    %v60 = vld [vmem:[%s0 + $0xc0] sm:$0xff]
    %v61 = vld [vmem:[%s0 + $0xc8] sm:$0xff]
    %v62 = vld [vmem:[%s0 + $0xd0] sm:$0xff]
    %v63 = vld [vmem:[%s0 + $0xd8] sm:$0xff]
    %v64 = vld [vmem:[%s0 + $0xe0] sm:$0xff]
    %v65 = vld [vmem:[%s0 + $0xe8] sm:$0xff]
    %v66 = vld [vmem:[%s0 + $0xf0] sm:$0xff]
    %v67 = vld [vmem:[%s0 + $0xf8] sm:$0xff]
    %v68 = vpack.c.bf16 %v37, %v36
    %v69 = vpack.c.bf16 %v39, %v38
    %v70 = vpack.c.bf16 %v41, %v40
    %v71 = vpack.c.bf16 %v43, %v42
    %v72 = vpack.c.bf16 %v45, %v44
    %v73 = vpack.c.bf16 %v47, %v46
    %v74 = vpack.c.bf16 %v49, %v48
    %v75 = vpack.c.bf16 %v51, %v50
    %v76 = vpack.c.bf16 %v53, %v52
    %v77 = vpack.c.bf16 %v55, %v54
    %v78 = vpack.c.bf16 %v57, %v56
    %v79 = vpack.c.bf16 %v59, %v58
    %v80 = vpack.c.bf16 %v61, %v60
    %v81 = vpack.c.bf16 %v63, %v62
    %v82 = vpack.c.bf16 %v65, %v64
    %v83 = vpack.c.bf16 %v67, %v66
    %v85 = vlaneseq
    %v86 = vshrl.u32 %v85, 7
    %v87 = vsub.s32 0, %v86
    %v88 = vrot.slane %v26, %v87
    %vm90 = vcmask 89088
    %v92 = vsel %vm90, %v68, 0
    %v95 = vsel %vm90, %v69, 0
    %v98 = vsel %vm90, %v70, 0
    %v101 = vsel %vm90, %v71, 0
    %v104 = vsel %vm90, %v72, 0
    %v107 = vsel %vm90, %v73, 0
    %v110 = vsel %vm90, %v74, 0
    %v113 = vsel %vm90, %v75, 0
    %v116 = vsel %vm90, %v76, 0
    %v119 = vsel %vm90, %v77, 0
    %v122 = vsel %vm90, %v78, 0
    %v125 = vsel %vm90, %v79, 0
    %v128 = vsel %vm90, %v80, 0
    %v131 = vsel %vm90, %v81, 0
    %v134 = vsel %vm90, %v82, 0
    %v137 = vsel %vm90, %v83, 0
    %vm139 = vcmask 1044480
    %vm140 = vcmask 1045504
    %v141 = vsel %vm139, 4294967295, 65535
    %v142 = vsel %vm140, %v141, 0
    %v144 = vand.u32 %v25, %v142
    %146 = vmatprep.subr.bf16.mxu0 0
    %147 = vmatpush1.bf16.msra.mxu0 %v144
    %148 = vmatprep.subr.bf16.mxu0 0
    %149 = vmatpush1.bf16.msra.mxu0 0
    %150 = vmatprep.subr.bf16.mxu0 0
    %151 = vmatpush1.bf16.msra.mxu0 0
    %152 = vmatprep.subr.bf16.mxu0 0
    %153 = vmatpush1.bf16.msra.mxu0 0
    %154 = vmatprep.subr.bf16.mxu0 0
    %155 = vmatpush1.bf16.msra.mxu0 0
    %156 = vmatprep.subr.bf16.mxu0 0
    %157 = vmatpush1.bf16.msra.mxu0 0
    %158 = vmatprep.subr.bf16.mxu0 0
    %159 = vmatpush1.bf16.msra.mxu0 0
    %160 = vmatprep.subr.bf16.mxu0 0
    %161 = vmatpush1.bf16.msra.mxu0 0
    %162 = vmatprep.subr.bf16.mxu0 0
    %163 = vmatpush1.bf16.msra.mxu0 0
    %164 = vmatprep.subr.bf16.mxu0 0
    %165 = vmatpush1.bf16.msra.mxu0 0
    %166 = vmatprep.subr.bf16.mxu0 0
    %167 = vmatpush1.bf16.msra.mxu0 0
    %168 = vmatprep.subr.bf16.mxu0 0
    %169 = vmatpush1.bf16.msra.mxu0 0
    %170 = vmatprep.subr.bf16.mxu0 0
    %171 = vmatpush1.bf16.msra.mxu0 0
    %172 = vmatprep.subr.bf16.mxu0 0
    %173 = vmatpush1.bf16.msra.mxu0 0
    %174 = vmatprep.subr.bf16.mxu0 0
    %175 = vmatpush1.bf16.msra.mxu0 0
    %176 = vmatprep.subr.bf16.mxu0 0
    %177 = vmatpush1.bf16.msra.mxu0 0
    %178 = vmatprep.mubr.bf16.mxu0 0
    %179 = vmatmul.mubr.bf16.gmra.mrb[0].mxu0 %v92
    %v180 = vpop.f32.mrb[0].mxu0
    %v181 = vadd.f32 %v88, %v180
    %v182 = vpop.f32.mrb[0].mxu0
    %v183 = vpop.f32.mrb[0].mxu0
    %v184 = vadd.f32 %v88, %v183
    %v185 = vpop.f32.mrb[0].mxu0
    %186 = vmatprep.mubr.bf16.mxu0 0
    %187 = vmatmul.mubr.bf16.gmra.mrb[0].mxu0 %v95
    %v188 = vpop.f32.mrb[0].mxu0
    %v189 = vadd.f32 %v88, %v188
    %v190 = vpop.f32.mrb[0].mxu0
    %v191 = vpop.f32.mrb[0].mxu0
    %v192 = vadd.f32 %v88, %v191
    %v193 = vpop.f32.mrb[0].mxu0
    %194 = vmatprep.mubr.bf16.mxu0 0
    %195 = vmatmul.mubr.bf16.gmra.mrb[0].mxu0 %v98
    %v196 = vpop.f32.mrb[0].mxu0
    %v197 = vadd.f32 %v88, %v196
    %v198 = vpop.f32.mrb[0].mxu0
    %v199 = vpop.f32.mrb[0].mxu0
    %v200 = vadd.f32 %v88, %v199
    %v201 = vpop.f32.mrb[0].mxu0
    %202 = vmatprep.mubr.bf16.mxu0 0
    %203 = vmatmul.mubr.bf16.gmra.mrb[0].mxu0 %v101
    %v204 = vpop.f32.mrb[0].mxu0
    %v205 = vadd.f32 %v88, %v204
    %v206 = vpop.f32.mrb[0].mxu0
    %v207 = vpop.f32.mrb[0].mxu0
    %v208 = vadd.f32 %v88, %v207
    %v209 = vpop.f32.mrb[0].mxu0
    %210 = vmatprep.mubr.bf16.mxu0 0
    %211 = vmatmul.mubr.bf16.gmra.mrb[0].mxu0 %v104
    %v212 = vpop.f32.mrb[0].mxu0
    %v213 = vadd.f32 %v88, %v212
    %v214 = vpop.f32.mrb[0].mxu0
    %v215 = vpop.f32.mrb[0].mxu0
    %v216 = vadd.f32 %v88, %v215
    %v217 = vpop.f32.mrb[0].mxu0
    %218 = vmatprep.mubr.bf16.mxu0 0
    %219 = vmatmul.mubr.bf16.gmra.mrb[0].mxu0 %v107
    %v220 = vpop.f32.mrb[0].mxu0
    %v221 = vadd.f32 %v88, %v220
    %v222 = vpop.f32.mrb[0].mxu0
    %v223 = vpop.f32.mrb[0].mxu0
    %v224 = vadd.f32 %v88, %v223
    %v225 = vpop.f32.mrb[0].mxu0
    %226 = vmatprep.mubr.bf16.mxu0 0
    %227 = vmatmul.mubr.bf16.gmra.mrb[0].mxu0 %v110
    %v228 = vpop.f32.mrb[0].mxu0
    %v229 = vadd.f32 %v88, %v228
    %v230 = vpop.f32.mrb[0].mxu0
    %v231 = vpop.f32.mrb[0].mxu0
    %v232 = vadd.f32 %v88, %v231
    %v233 = vpop.f32.mrb[0].mxu0
    %234 = vmatprep.mubr.bf16.mxu0 0
    %235 = vmatmul.mubr.bf16.gmra.mrb[0].mxu0 %v113
    %v236 = vpop.f32.mrb[0].mxu0
    %v237 = vadd.f32 %v88, %v236
    %v238 = vpop.f32.mrb[0].mxu0
    %v239 = vpop.f32.mrb[0].mxu0
    %v240 = vadd.f32 %v88, %v239
    %v241 = vpop.f32.mrb[0].mxu0
    %242 = vmatprep.mubr.bf16.mxu0 0
    %243 = vmatmul.mubr.bf16.gmra.mrb[0].mxu0 %v116
    %v244 = vpop.f32.mrb[0].mxu0
    %v245 = vadd.f32 %v88, %v244
    %v246 = vpop.f32.mrb[0].mxu0
    %v247 = vpop.f32.mrb[0].mxu0
    %v248 = vadd.f32 %v88, %v247
    %v249 = vpop.f32.mrb[0].mxu0
    %250 = vmatprep.mubr.bf16.mxu0 0
    %251 = vmatmul.mubr.bf16.gmra.mrb[0].mxu0 %v119
    %v252 = vpop.f32.mrb[0].mxu0
    %v253 = vadd.f32 %v88, %v252
    %v254 = vpop.f32.mrb[0].mxu0
    %v255 = vpop.f32.mrb[0].mxu0
    %v256 = vadd.f32 %v88, %v255
    %v257 = vpop.f32.mrb[0].mxu0
    %258 = vmatprep.mubr.bf16.mxu0 0
    %259 = vmatmul.mubr.bf16.gmra.mrb[0].mxu0 %v122
    %v260 = vpop.f32.mrb[0].mxu0
    %v261 = vadd.f32 %v88, %v260
    %v262 = vpop.f32.mrb[0].mxu0
    %v263 = vpop.f32.mrb[0].mxu0
    %v264 = vadd.f32 %v88, %v263
    %v265 = vpop.f32.mrb[0].mxu0
    %266 = vmatprep.mubr.bf16.mxu0 0
    %267 = vmatmul.mubr.bf16.gmra.mrb[0].mxu0 %v125
    %v268 = vpop.f32.mrb[0].mxu0
    %v269 = vadd.f32 %v88, %v268
    %v270 = vpop.f32.mrb[0].mxu0
    %v271 = vpop.f32.mrb[0].mxu0
    %v272 = vadd.f32 %v88, %v271
    %v273 = vpop.f32.mrb[0].mxu0
    %274 = vmatprep.mubr.bf16.mxu0 0
    %275 = vmatmul.mubr.bf16.gmra.mrb[0].mxu0 %v128
    %v276 = vpop.f32.mrb[0].mxu0
    %v277 = vadd.f32 %v88, %v276
    %v278 = vpop.f32.mrb[0].mxu0
    %v279 = vpop.f32.mrb[0].mxu0
    %v280 = vadd.f32 %v88, %v279
    %v281 = vpop.f32.mrb[0].mxu0
    %282 = vmatprep.mubr.bf16.mxu0 0
    %283 = vmatmul.mubr.bf16.gmra.mrb[0].mxu0 %v131
    %v284 = vpop.f32.mrb[0].mxu0
    %v285 = vadd.f32 %v88, %v284
    %v286 = vpop.f32.mrb[0].mxu0
    %v287 = vpop.f32.mrb[0].mxu0
    %v288 = vadd.f32 %v88, %v287
    %v289 = vpop.f32.mrb[0].mxu0
    %290 = vmatprep.mubr.bf16.mxu0 0
    %291 = vmatmul.mubr.bf16.gmra.mrb[0].mxu0 %v134
    %v292 = vpop.f32.mrb[0].mxu0
    %v293 = vadd.f32 %v88, %v292
    %v294 = vpop.f32.mrb[0].mxu0
    %v295 = vpop.f32.mrb[0].mxu0
    %v296 = vadd.f32 %v88, %v295
    %v297 = vpop.f32.mrb[0].mxu0
    %298 = vmatprep.mubr.bf16.mxu0 0
    %299 = vmatmul.mubr.bf16.gmra.mrb[0].mxu0 %v137
    %v300 = vpop.f32.mrb[0].mxu0
    %v301 = vadd.f32 %v88, %v300
    %v302 = vpop.f32.mrb[0].mxu0
    %v303 = vpop.f32.mrb[0].mxu0
    %v304 = vadd.f32 %v88, %v303
    %v305 = vpop.f32.mrb[0].mxu0
    %306 = vdwg.mxu0
    %v307 = vmax.f32 %v181, 0.0
    %v308 = vmax.f32 %v184, 0.0
    %v309 = vmax.f32 %v189, 0.0
    %v310 = vmax.f32 %v192, 0.0
    %v311 = vmax.f32 %v197, 0.0
    %v312 = vmax.f32 %v200, 0.0
    %v313 = vmax.f32 %v205, 0.0
    %v314 = vmax.f32 %v208, 0.0
    %v315 = vmax.f32 %v213, 0.0
    %v316 = vmax.f32 %v216, 0.0
    %v317 = vmax.f32 %v221, 0.0
    %v318 = vmax.f32 %v224, 0.0
    %v319 = vmax.f32 %v229, 0.0
    %v320 = vmax.f32 %v232, 0.0
    %v321 = vmax.f32 %v237, 0.0
    %v322 = vmax.f32 %v240, 0.0
    %v323 = vmax.f32 %v245, 0.0
    %v324 = vmax.f32 %v248, 0.0
    %v325 = vmax.f32 %v253, 0.0
    %v326 = vmax.f32 %v256, 0.0
    %v327 = vmax.f32 %v261, 0.0
    %v328 = vmax.f32 %v264, 0.0
    %v329 = vmax.f32 %v269, 0.0
    %v330 = vmax.f32 %v272, 0.0
    %v331 = vmax.f32 %v277, 0.0
    %v332 = vmax.f32 %v280, 0.0
    %v333 = vmax.f32 %v285, 0.0
    %v334 = vmax.f32 %v288, 0.0
    %v335 = vmax.f32 %v293, 0.0
    %v336 = vmax.f32 %v296, 0.0
    %v337 = vmax.f32 %v301, 0.0
    %v338 = vmax.f32 %v304, 0.0
    %v339 = vpack.c.bf16 %v308, %v307
    %v340 = vpack.c.bf16 %v310, %v309
    %v341 = vpack.c.bf16 %v312, %v311
    %v342 = vpack.c.bf16 %v314, %v313
    %v343 = vpack.c.bf16 %v316, %v315
    %v344 = vpack.c.bf16 %v318, %v317
    %v345 = vpack.c.bf16 %v320, %v319
    %v346 = vpack.c.bf16 %v322, %v321
    %v347 = vpack.c.bf16 %v324, %v323
    %v348 = vpack.c.bf16 %v326, %v325
    %v349 = vpack.c.bf16 %v328, %v327
    %v350 = vpack.c.bf16 %v330, %v329
    %v351 = vpack.c.bf16 %v332, %v331
    %v352 = vpack.c.bf16 %v334, %v333
    %v353 = vpack.c.bf16 %v336, %v335
    %v354 = vpack.c.bf16 %v338, %v337
    %355 = vmatprep.subr.bf16.mxu0 0
    %356 = vmatpush1.bf16.xpose.msra.mxu0 %v339
    %357 = vmatprep.subr.bf16.mxu0 0
    %358 = vmatpush1.bf16.xpose.msra.mxu0 %v340
    %359 = vmatprep.subr.bf16.mxu0 0
    %360 = vmatpush1.bf16.xpose.msra.mxu0 %v341
    %361 = vmatprep.subr.bf16.mxu0 0
    %362 = vmatpush1.bf16.xpose.msra.mxu0 %v342
    %363 = vmatprep.subr.bf16.mxu0 0
    %364 = vmatpush1.bf16.xpose.msra.mxu0 %v343
    %365 = vmatprep.subr.bf16.mxu0 0
    %366 = vmatpush1.bf16.xpose.msra.mxu0 %v344
    %367 = vmatprep.subr.bf16.mxu0 0
    %368 = vmatpush1.bf16.xpose.msra.mxu0 %v345
    %369 = vmatprep.subr.bf16.mxu0 0
    %370 = vmatpush1.bf16.xpose.msra.mxu0 %v346
    %371 = vmatprep.subr.bf16.mxu0 0
    %372 = vmatpush1.bf16.xpose.msra.mxu0 %v347
    %373 = vmatprep.subr.bf16.mxu0 0
    %374 = vmatpush1.bf16.xpose.msra.mxu0 %v348
    %375 = vmatprep.subr.bf16.mxu0 0
    %376 = vmatpush1.bf16.xpose.msra.mxu0 %v349
    %377 = vmatprep.subr.bf16.mxu0 0
    %378 = vmatpush1.bf16.xpose.msra.mxu0 %v350
    %379 = vmatprep.subr.bf16.mxu0 0
    %380 = vmatpush1.bf16.xpose.msra.mxu0 %v351
    %381 = vmatprep.subr.bf16.mxu0 0
    %382 = vmatpush1.bf16.xpose.msra.mxu0 %v352
    %383 = vmatprep.subr.bf16.mxu0 0
    %384 = vmatpush1.bf16.xpose.msra.mxu0 %v353
    %385 = vmatprep.subr.bf16.mxu0 0
    %386 = vmatpush1.bf16.xpose.msra.mxu0 %v354
    %387 = vmatprep.mubr.bf16.mxu0 0
    %388 = vmatmul.mubr.bf16.gmra.mrb[0].mxu0 %v34
    %v389 = vpop.f32.mrb[0].mxu0
    %v390 = vadd.f32 0.0, %v389
    %v391 = vpop.f32.mrb[0].mxu0
    %v392 = vadd.f32 0.0, %v391
    %v393 = vpop.f32.mrb[0].mxu0
    %v394 = vpop.f32.mrb[0].mxu0
    %395 = vdwg.mxu0
    %v396 = vstv %s35
    %v397 = vadd.f32 %v390, %v396
    %v398 = vadd.f32 %v392, %v396
    %v401 = vcombine.low %v397, %v398
    %v403 = vunpack.c.l.s4 1966171168
    %v404 = vunpack.c.0.s8 %v403
    %v405 = vlaneseq
    %v406 = vshrl.u32 %v405, 7
    %v407 = vsub.s32 %v404, %v406
    %v408 = vrot.slane %v401, %v407
    %v410 = vunpack.c.l.s4 1966171168
    %v411 = vunpack.c.0.s8 %v410
    %v412 = vlaneseq
    %v413 = vshrl.u32 %v412, 7
    %v414 = vsub.s32 %v411, %v413
    %v415 = vrot.slane %v408, %v414
    %v417 = vlaneseq
    %vm418 = vcmp.ge.s32.totalorder %v417, 0
    %vm419 = vcmp.lt.s32.totalorder %v417, 256
    %vm420 = vmand %vm418, %vm419
    %421 = vst.msk [vmem:[#allocation3] sm:$0x3] %vm420, %v415
    // Predicated region
    $region22: #{tpu_custom_call.1} parent=1 // pred_check
      _
    $region23: #{tpu_custom_call.1} parent=1 // pred_check_branch
      %423 = sbr.rel (0) target = $region25
    $region24: #{tpu_custom_call.1} parent=1 // pred_region
      %s425 = ssub.s32 32, 32
      %426 = vsyncadd [#allocation4], %s425
      %s428 = sshll.u32 [#allocation3], 4
      %s429 = int_to_ptr.vmem [resolvable:$true] %s428
      %431 = dma.vmem_to_hbm [thread:$0]  %s429, 32, %s5, [#allocation4]
    $region25: #{tpu_custom_call.1} parent=1 // pred_fallthru
      _
    // Predicated region
    $region26: #{tpu_custom_call.1} parent=1 // pred_check
      _
    $region27: #{tpu_custom_call.1} parent=1 // pred_check_branch
      %433 = sbr.rel (0) target = $region29
    $region28: #{tpu_custom_call.1} parent=1 // pred_region
      %434 = dma.done [#allocation4], 32
    $region29: #{tpu_custom_call.1} parent=1 // pred_fallthru
      _
    %435 = vsyncpa [#allocation4], 1

</llo_original>
